<compile_context>
chip_gen: v7x
topology: tpu7x:2x2x1
jax: 0.10.0
libtpu: 0.0.40
codegen_flags: <defaults>
</compile_context>

<pallas_src>
import math

import numpy as np

import jax
import jax.numpy as jnp
from jax.experimental import pallas as pl
from jax.experimental.pallas import tpu as pltpu

BN_EPS = 1e-5
LANE = 128               # padded feature width for every hidden layer (dims <= 128)
DEFAULT_TILE_N = 512     # batch tile; fits easily in scoped VMEM on v5e/v6e/v7x


def _round_up(n, m):
    return ((n + m - 1) // m) * m


# ---------------------------------------------------------------------------
# Fused kernel (whole network unrolled; weights resident in VMEM)
# ---------------------------------------------------------------------------
def make_fused_kernel(n_layers, k0):
    """Build the fused kernel body.

    Refs (all VMEM):
      x_ref : (TILE_N, k0)    f32  input rows (k0 = input_size rounded up to 8)
      w_ref : (L, 128, 256)   bf16 per-layer [ main | residual ] weight slabs
                                   (BN folded into main; residual = adapter W,
                                    or identity for the no-adapter layer 0)
      b_ref : (L+1, 1, 256)   f32  per-layer [ main bias | residual bias ];
                                   row L: final Linear row in lanes [:128],
                                   its bias at lane 128
      o_ref : (TILE_N, 1)     f32  output
    """

    def kernel(x_ref, w_ref, b_ref, o_ref):
        b_all = b_ref[...]                                   # (L+1, 1, 256) f32
        out = x_ref[...]                                     # (TILE_N, k0)  f32
        for i in range(n_layers):
            # One fused main+residual matmul: a single 256-lane MXU pass.
            w = w_ref[0, :k0, :] if i == 0 else w_ref[i]     # (K, 256) bf16
            y = jnp.dot(out.astype(jnp.bfloat16), w,
                        preferred_element_type=jnp.float32) + b_all[i]
            h = jnp.maximum(y[:, :LANE], 0.0)                # ReLU(BN(Linear(out)))
            res = y[:, LANE:]                                # adapter / identity residual
            out = h + res                                    # (TILE_N, 128) f32
        # Final Linear(dim, 1): VPU multiply + lane reduction, not a 1-wide matmul.
        ow = b_all[n_layers, :, :LANE]                       # (1, 128)
        ob = b_all[n_layers, :, LANE:LANE + 1]               # (1, 1)
        o_ref[...] = jnp.sum(out * ow, axis=-1, keepdims=True) + ob

    return kernel


def irnet_forward(x, kp, tile_n=DEFAULT_TILE_N):
    """Kernel-backed forward pass. x: (N, input_size) float32 -> (N, 1)."""
    n = x.shape[0]
    k0 = kp["k0"]
    x = x.astype(jnp.float32)
    if x.shape[1] != k0:                        # only if input_size % 8 != 0
        x = jnp.pad(x, ((0, 0), (0, k0 - x.shape[1])))

    tile = n if n <= tile_n else tile_n
    grid = (pl.cdiv(n, tile),)
    w_stack, b_stack = kp["w_stack"], kp["b_stack"]
    n_layers = int(w_stack.shape[0])

    return pl.pallas_call(
        make_fused_kernel(n_layers, k0),
        out_shape=jax.ShapeDtypeStruct((n, 1), jnp.float32),
        grid=grid,
        in_specs=[
            pl.BlockSpec((tile, k0), lambda i: (i, 0)),        # batch-tiled input
            pl.BlockSpec(w_stack.shape, lambda i: (0, 0, 0)),  # resident weights
            pl.BlockSpec(b_stack.shape, lambda i: (0, 0, 0)),  # resident biases
        ],
        out_specs=pl.BlockSpec((tile, 1), lambda i: (i, 0)),
        compiler_params=pltpu.CompilerParams(
            dimension_semantics=("parallel",)),                # both v7x cores work
    )(x, w_stack, b_stack)


# ---------------------------------------------------------------------------
# Parameter construction (matches nn.Linear / BatchNorm1d fresh init)
# ---------------------------------------------------------------------------
def init_linear(key, in_dim, out_dim):
    kw, kb = jax.random.split(key)
    bound = 1.0 / math.sqrt(in_dim)
    w = jax.random.uniform(kw, (in_dim, out_dim), jnp.float32, -bound, bound)
    b = jax.random.uniform(kb, (out_dim,), jnp.float32, -bound, bound)
    return w, b


def build_raw_params(key, input_size, layer_dims):
    layers = []
    prev = input_size
    for dim in layer_dims:
        key, k_fc, k_ad = jax.random.split(key, 3)
        w, b = init_linear(k_fc, prev, dim)
        layers.append(dict(
            w=w, b=b,
            gamma=jnp.ones((dim,), jnp.float32),
            beta=jnp.zeros((dim,), jnp.float32),
            mean=jnp.zeros((dim,), jnp.float32),
            var=jnp.ones((dim,), jnp.float32),
            adapter=init_linear(k_ad, prev, dim) if dim != prev else None))
        prev = dim
    key, k_out = jax.random.split(key)
    return dict(layers=layers, out=init_linear(k_out, prev, 1))


def fold_and_pack(raw, input_size, layer_dims):
    """Fold BN+bias into the weights, fuse main+adapter into one 256-lane slab
    per layer, and pack everything into two stacked arrays."""
    L = len(layer_dims)
    assert max(layer_dims) <= LANE and input_size <= LANE
    k0 = _round_up(input_size, 8)

    w_np = np.zeros((L, LANE, 2 * LANE), np.float32)
    b_np = np.zeros((L + 1, 1, 2 * LANE), np.float32)

    prev = input_size
    for i, (dim, lp) in enumerate(zip(layer_dims, raw["layers"])):
        scale = np.asarray(lp["gamma"]) / np.sqrt(np.asarray(lp["var"]) + BN_EPS)
        w_np[i, :prev, :dim] = np.asarray(lp["w"]) * scale[None, :]
        b_np[i, 0, :dim] = ((np.asarray(lp["b"]) - np.asarray(lp["mean"])) * scale
                            + np.asarray(lp["beta"]))
        if lp["adapter"] is not None:
            aw, ab = lp["adapter"]
            w_np[i, :prev, LANE:LANE + dim] = np.asarray(aw)
            b_np[i, 0, LANE:LANE + dim] = np.asarray(ab)
        else:
            # Residual is the ORIGINAL input x.  At layer 0 out == x, so an
            # identity residual matrix reproduces it exactly (and pads x to
            # 128 lanes for free on the MXU).
            # TODO(synk): a no-adapter layer at position > 0 would need the
            # original x, not the running activation; not supported here.
            assert i == 0, "identity residual only supported at layer 0"
            w_np[i, :prev, LANE:LANE + prev] = np.eye(prev, dtype=np.float32)
        prev = dim

    ow, ob = raw["out"]                               # (prev, 1), (1,)
    b_np[L, 0, :prev] = np.asarray(ow)[:, 0]
    b_np[L, 0, LANE] = float(np.asarray(ob)[0])

    return dict(
        w_stack=jnp.asarray(w_np).astype(jnp.bfloat16),   # bf16: MXU-native, half DMA
        b_stack=jnp.asarray(b_np),                        # f32 biases + final row
        k0=k0)


# ---------------------------------------------------------------------------
# Pure-JAX references
# ---------------------------------------------------------------------------
def irnet_forward_ref(x, raw):
    """Semantic f32 reference (eval-mode BN, Dropout = identity)."""
    out = x
    for lp in raw["layers"]:
        h = out @ lp["w"] + lp["b"]
        h = (h - lp["mean"]) * jax.lax.rsqrt(lp["var"] + BN_EPS) * lp["gamma"] \
            + lp["beta"]
        h = jnp.maximum(h, 0.0)
        if lp["adapter"] is not None:
            aw, ab = lp["adapter"]
            res = out @ aw + ab
        else:
            res = x
        out = h + res
    ow, ob = raw["out"]
    return out @ ow + ob


def irnet_forward_packed_ref(x, kp):
    """Plain-JAX re-execution of the exact packed bf16 math (tight check)."""
    w, b, k0 = kp["w_stack"], kp["b_stack"], kp["k0"]
    L = int(w.shape[0])
    out = x.astype(jnp.float32)
    if out.shape[1] != k0:
        out = jnp.pad(out, ((0, 0), (0, k0 - out.shape[1])))
    for i in range(L):
        wi = w[0, :k0, :] if i == 0 else w[i]
        y = jnp.dot(out.astype(jnp.bfloat16), wi,
                    preferred_element_type=jnp.float32) + b[i]
        out = jnp.maximum(y[:, :LANE], 0.0) + y[:, LANE:]
    return (jnp.sum(out * b[L, :, :LANE], axis=-1, keepdims=True)
            + b[L, :, LANE:LANE + 1])


# ---------------------------------------------------------------------------
if __name__ == "__main__":
    INPUT_SIZE = 16
    LAYER_DIMS = [16, 32, 64]   # layer0: identity residual; layers 1,2: adapters
    BATCH = 8

    key = jax.random.PRNGKey(0)
    key, k_params, k_x, k_x2 = jax.random.split(key, 4)

    raw = build_raw_params(k_params, INPUT_SIZE, LAYER_DIMS)
    kp = fold_and_pack(raw, INPUT_SIZE, LAYER_DIMS)

    # Small batch (single grid step).
    x = jax.random.normal(k_x, (BATCH, INPUT_SIZE), jnp.float32)
    y = jax.block_until_ready(irnet_forward(x, kp))
    assert y.shape == (BATCH, 1)
    # Tight check: same packed bf16 math in plain JAX.
    assert jnp.allclose(y, irnet_forward_packed_ref(x, kp), atol=1e-3, rtol=1e-3), \
        "mismatch vs packed bf16 reference"
    # Semantic check vs full-f32 unfolded reference (bf16-weight tolerance).
    assert jnp.allclose(y, irnet_forward_ref(x, raw), atol=5e-2, rtol=5e-2), \
        "mismatch vs f32 reference"

    # Larger batch exercising the batch grid (2 tiles of 512, 'parallel' axis).
    x2 = jax.random.normal(k_x2, (1024, INPUT_SIZE), jnp.float32)
    y2 = jax.block_until_ready(irnet_forward(x2, kp))
    assert y2.shape == (1024, 1)
    assert jnp.allclose(y2, irnet_forward_packed_ref(x2, kp), atol=1e-3, rtol=1e-3)
    assert jnp.allclose(y2, irnet_forward_ref(x2, raw), atol=5e-2, rtol=5e-2)

    print("KERNEL_OK")
</pallas_src>

<mosaic_0001>
module attributes {stable_mosaic.version = 11 : i64} {
  func.func @kernel(%arg0: i32, %arg1: memref<8x16xf32, #tpu.memory_space<vmem>>, %arg2: memref<3x128x256xbf16, #tpu.memory_space<vmem>>, %arg3: memref<4x1x256xf32, #tpu.memory_space<vmem>>, %arg4: memref<8x1xf32, #tpu.memory_space<vmem>>) attributes {dimension_semantics = [#tpu.dimension_semantics<parallel>], iteration_bounds = array<i64: 1>, scalar_prefetch = 0 : i64, scratch_operands = 0 : i64, tpu.core_type = #tpu.core_type<tc>, window_params = [{transform_indices = @transform_0, window_bounds = array<i64: 8, 16>}, {pipeline_mode = #tpu.pipeline_mode<synchronous>, transform_indices = @transform_1, window_bounds = array<i64: 3, 128, 256>}, {pipeline_mode = #tpu.pipeline_mode<synchronous>, transform_indices = @transform_2, window_bounds = array<i64: 4, 1, 256>}, {transform_indices = @transform_3, window_bounds = array<i64: 8, 1>}]} {
    %c0 = arith.constant 0 : index
    %c0_0 = arith.constant 0 : index
    %c0_1 = arith.constant 0 : index
    %0 = vector.load %arg3[%c0, %c0_0, %c0_1] : memref<4x1x256xf32, #tpu.memory_space<vmem>>, vector<4x1x256xf32>
    %c0_2 = arith.constant 0 : index
    %c0_3 = arith.constant 0 : index
    %1 = vector.load %arg1[%c0_2, %c0_3] : memref<8x16xf32, #tpu.memory_space<vmem>>, vector<8x16xf32>
    %c0_4 = arith.constant 0 : index
    %c0_5 = arith.constant 0 : index
    %c0_6 = arith.constant 0 : index
    %2 = vector.load %arg2[%c0_4, %c0_5, %c0_6] : memref<3x128x256xbf16, #tpu.memory_space<vmem>>, vector<1x16x256xbf16>
    %3 = vector.shape_cast %2 : vector<1x16x256xbf16> to vector<16x256xbf16>
    %4 = arith.truncf %1 : vector<8x16xf32> to vector<8x16xbf16>
    %cst = arith.constant dense<0.000000e+00> : vector<8x256xf32>
    %5 = tpu.matmul %4, %3, %cst {dimension_numbers = #tpu.dot_dimension_numbers<[1], [0], [0], [1], [0, 0, 1, 1], [], []>} : vector<8x16xbf16>, vector<16x256xbf16>, vector<8x256xf32> -> vector<8x256xf32>
    %6 = vector.extract_strided_slice %0 {offsets = [0, 0, 0], sizes = [1, 1, 256], strides = [1, 1, 1]} : vector<4x1x256xf32> to vector<1x1x256xf32>
    %7 = vector.shape_cast %6 : vector<1x1x256xf32> to vector<1x256xf32>
    %8 = vector.broadcast %7 : vector<1x256xf32> to vector<8x256xf32>
    %9 = arith.addf %5, %8 : vector<8x256xf32>
    %10 = vector.extract_strided_slice %9 {offsets = [0, 0], sizes = [8, 128], strides = [1, 1]} : vector<8x256xf32> to vector<8x128xf32>
    %cst_7 = arith.constant 0.000000e+00 : f32
    %11 = vector.broadcast %cst_7 : f32 to vector<8x128xf32>
    %12 = arith.maximumf %10, %11 : vector<8x128xf32>
    %13 = vector.extract_strided_slice %9 {offsets = [0, 128], sizes = [8, 128], strides = [1, 1]} : vector<8x256xf32> to vector<8x128xf32>
    %14 = arith.addf %12, %13 : vector<8x128xf32>
    %c1 = arith.constant 1 : index
    %c0_8 = arith.constant 0 : index
    %c0_9 = arith.constant 0 : index
    %15 = vector.load %arg2[%c1, %c0_8, %c0_9] : memref<3x128x256xbf16, #tpu.memory_space<vmem>>, vector<1x128x256xbf16>
    %16 = vector.shape_cast %15 : vector<1x128x256xbf16> to vector<128x256xbf16>
    %17 = arith.truncf %14 : vector<8x128xf32> to vector<8x128xbf16>
    %cst_10 = arith.constant dense<0.000000e+00> : vector<8x256xf32>
    %18 = tpu.matmul %17, %16, %cst_10 {dimension_numbers = #tpu.dot_dimension_numbers<[1], [0], [0], [1], [0, 0, 1, 1], [], []>} : vector<8x128xbf16>, vector<128x256xbf16>, vector<8x256xf32> -> vector<8x256xf32>
    %19 = vector.extract_strided_slice %0 {offsets = [1, 0, 0], sizes = [1, 1, 256], strides = [1, 1, 1]} : vector<4x1x256xf32> to vector<1x1x256xf32>
    %20 = vector.shape_cast %19 : vector<1x1x256xf32> to vector<1x256xf32>
    %21 = vector.broadcast %20 : vector<1x256xf32> to vector<8x256xf32>
    %22 = arith.addf %18, %21 : vector<8x256xf32>
    %23 = vector.extract_strided_slice %22 {offsets = [0, 0], sizes = [8, 128], strides = [1, 1]} : vector<8x256xf32> to vector<8x128xf32>
    %cst_11 = arith.constant 0.000000e+00 : f32
    %24 = vector.broadcast %cst_11 : f32 to vector<8x128xf32>
    %25 = arith.maximumf %23, %24 : vector<8x128xf32>
    %26 = vector.extract_strided_slice %22 {offsets = [0, 128], sizes = [8, 128], strides = [1, 1]} : vector<8x256xf32> to vector<8x128xf32>
    %27 = arith.addf %25, %26 : vector<8x128xf32>
    %c2 = arith.constant 2 : index
    %c0_12 = arith.constant 0 : index
    %c0_13 = arith.constant 0 : index
    %28 = vector.load %arg2[%c2, %c0_12, %c0_13] : memref<3x128x256xbf16, #tpu.memory_space<vmem>>, vector<1x128x256xbf16>
    %29 = vector.shape_cast %28 : vector<1x128x256xbf16> to vector<128x256xbf16>
    %30 = arith.truncf %27 : vector<8x128xf32> to vector<8x128xbf16>
    %cst_14 = arith.constant dense<0.000000e+00> : vector<8x256xf32>
    %31 = tpu.matmul %30, %29, %cst_14 {dimension_numbers = #tpu.dot_dimension_numbers<[1], [0], [0], [1], [0, 0, 1, 1], [], []>} : vector<8x128xbf16>, vector<128x256xbf16>, vector<8x256xf32> -> vector<8x256xf32>
    %32 = vector.extract_strided_slice %0 {offsets = [2, 0, 0], sizes = [1, 1, 256], strides = [1, 1, 1]} : vector<4x1x256xf32> to vector<1x1x256xf32>
    %33 = vector.shape_cast %32 : vector<1x1x256xf32> to vector<1x256xf32>
    %34 = vector.broadcast %33 : vector<1x256xf32> to vector<8x256xf32>
    %35 = arith.addf %31, %34 : vector<8x256xf32>
    %36 = vector.extract_strided_slice %35 {offsets = [0, 0], sizes = [8, 128], strides = [1, 1]} : vector<8x256xf32> to vector<8x128xf32>
    %cst_15 = arith.constant 0.000000e+00 : f32
    %37 = vector.broadcast %cst_15 : f32 to vector<8x128xf32>
    %38 = arith.maximumf %36, %37 : vector<8x128xf32>
    %39 = vector.extract_strided_slice %35 {offsets = [0, 128], sizes = [8, 128], strides = [1, 1]} : vector<8x256xf32> to vector<8x128xf32>
    %40 = arith.addf %38, %39 : vector<8x128xf32>
    %41 = vector.extract_strided_slice %0 {offsets = [3, 0, 0], sizes = [1, 1, 128], strides = [1, 1, 1]} : vector<4x1x256xf32> to vector<1x1x128xf32>
    %42 = vector.shape_cast %41 : vector<1x1x128xf32> to vector<1x128xf32>
    %43 = vector.extract_strided_slice %0 {offsets = [3, 0, 128], sizes = [1, 1, 1], strides = [1, 1, 1]} : vector<4x1x256xf32> to vector<1x1x1xf32>
    %44 = vector.shape_cast %43 : vector<1x1x1xf32> to vector<1x1xf32>
    %45 = vector.broadcast %42 : vector<1x128xf32> to vector<8x128xf32>
    %46 = arith.mulf %40, %45 : vector<8x128xf32>
    %cst_16 = arith.constant dense<0.000000e+00> : vector<8xf32>
    %47 = vector.multi_reduction <add>, %46, %cst_16 [1] : vector<8x128xf32> to vector<8xf32>
    %48 = vector.shape_cast %47 : vector<8xf32> to vector<8x1xf32>
    %49 = vector.broadcast %44 : vector<1x1xf32> to vector<8x1xf32>
    %50 = arith.addf %48, %49 : vector<8x1xf32>
    %c0_17 = arith.constant 0 : index
    %c0_18 = arith.constant 0 : index
    %51 = vector.load %arg4[%c0_17, %c0_18] : memref<8x1xf32, #tpu.memory_space<vmem>>, vector<8x1xf32>
    tpu.vector_store %arg4[%c0_17, %c0_18], %50 {strides = array<i32>} : memref<8x1xf32, #tpu.memory_space<vmem>>, vector<8x1xf32>,
    return
  }
  func.func @transform_0(%arg0: i32) -> (i32, i32) {
    %c0_i32 = arith.constant 0 : i32
    %c0_i32_0 = arith.constant 0 : i32
    return %arg0, %c0_i32 : i32, i32
  }
  func.func @transform_1(%arg0: i32) -> (i32, i32, i32) {
    %c0_i32 = arith.constant 0 : i32
    %c0_i32_0 = arith.constant 0 : i32
    %c0_i32_1 = arith.constant 0 : i32
    %c0_i32_2 = arith.constant 0 : i32
    return %c0_i32, %c0_i32_0, %c0_i32_1 : i32, i32, i32
  }
  func.func @transform_2(%arg0: i32) -> (i32, i32, i32) {
    %c0_i32 = arith.constant 0 : i32
    %c0_i32_0 = arith.constant 0 : i32
    %c0_i32_1 = arith.constant 0 : i32
    %c0_i32_2 = arith.constant 0 : i32
    return %c0_i32, %c0_i32_0, %c0_i32_1 : i32, i32, i32
  }
  func.func @transform_3(%arg0: i32) -> (i32, i32) {
    %c0_i32 = arith.constant 0 : i32
    %c0_i32_0 = arith.constant 0 : i32
    return %arg0, %c0_i32 : i32, i32
  }
}

</mosaic_0001>

<llo_original>
// kernel: tpu_custom_call.1
$region0: #{tpu_custom_call.1}
  #allocation0 [shape = 'u32[]', space=smem, size = 0x4, offset = 0x4, fixed_abs, tag = 'smem constant byte address 0x4 - core index']
  #allocation1 [shape = 'u32[144,128]{1,0:T(1,128)}', space=vmem, size = 0x12000, scoped, tag = 'internal scratch']
  %s0 = inlined_call_operand.hbm [shape: f32[8,16], index: 0, kind: input, shape index: {}]
  %s1 = inlined_call_operand.hbm [shape: bf16[3,128,256], index: 1, kind: input, shape index: {}]
  %s2 = inlined_call_operand.hbm [shape: f32[4,1,256], index: 2, kind: input, shape index: {}]
  %s3 = inlined_call_operand.vmem [shape: f32[8,1], index: 3, kind: output, shape index: {}]
  %s4 = sld [smem:[#allocation0]]
  $region34: #{tpu_custom_call.1} parent=0
    _
  %s6 = ssub.s32 1, %s4
  %s7 = scalar_select 0, %s6, %s4
  $region1: #{tpu_custom_call.1} parent=0
    #allocation2 [shape = 'u8[4096]{0}', space=vmem, size = 0x1000, scoped, tag = 'input window, operand 0, single buffered']
    #allocation3 [shape = 's32[1]{0}', space=sflag, size = 0x4, scoped, tag = 'scoped memory for tpu_custom_call.1']
    #allocation4 [shape = 'u8[196608]{0}', space=vmem, size = 0x30000, scoped, tag = 'input window, operand 1, single buffered']
    #allocation5 [shape = 's32[1]{0}', space=sflag, size = 0x4, scoped, tag = 'scoped memory for tpu_custom_call.1']
    #allocation6 [shape = 'u8[4096]{0}', space=vmem, size = 0x1000, scoped, tag = 'input window, operand 2, single buffered']
    %8 = vsyncpa [#allocation3], 0
    %9 = vsyncpa [#allocation5], 0
    // Predicated region
    $region2: #{tpu_custom_call.1} parent=1 // pred_check
      _
    $region3: #{tpu_custom_call.1} parent=1 // pred_check_branch
      %11 = sbr.rel (0) target = $region5
    $region4: #{tpu_custom_call.1} parent=1 // pred_region
      %s13 = ssub.s32 128, 128
      %14 = vsyncadd [#allocation3], %s13
      %s16 = sshll.u32 [#allocation2], 4
      %s17 = int_to_ptr.vmem [resolvable:$true] %s16
      %19 = dma.hbm_to_vmem [thread:$0]  %s0, 128, %s17, [#allocation3]
    $region5: #{tpu_custom_call.1} parent=1 // pred_fallthru
      _
    // Predicated region
    $region6: #{tpu_custom_call.1} parent=1 // pred_check
      _
    $region7: #{tpu_custom_call.1} parent=1 // pred_check_branch
      %21 = sbr.rel (0) target = $region9
    $region8: #{tpu_custom_call.1} parent=1 // pred_region
      %s23 = ssub.s32 6144, 6144
      %24 = vsyncadd [#allocation5], %s23
      %s25 = sshll.u32 [#allocation4], 4
      %s26 = int_to_ptr.vmem [resolvable:$true] %s25
      %31 = dma.hbm_to_vmem [thread:$0]  %s1, 6144, %s26, [#allocation5], 128, 128, 8
    $region9: #{tpu_custom_call.1} parent=1 // pred_fallthru
      _
    // Predicated region
    $region10: #{tpu_custom_call.1} parent=1 // pred_check
      _
    $region11: #{tpu_custom_call.1} parent=1 // pred_check_branch
      %33 = sbr.rel (0) target = $region13
    $region12: #{tpu_custom_call.1} parent=1 // pred_region
      %s35 = ssub.s32 128, 128
      %36 = vsyncadd [#allocation5], %s35
      %s37 = sshll.u32 [#allocation6], 4
      %s38 = int_to_ptr.vmem [resolvable:$true] %s37
      %43 = dma.hbm_to_vmem [thread:$0]  %s2, 128, %s38, [#allocation5], 32, 32, 2
    $region13: #{tpu_custom_call.1} parent=1 // pred_fallthru
      _
    // Predicated region
    $region14: #{tpu_custom_call.1} parent=1 // pred_check
      _
    $region15: #{tpu_custom_call.1} parent=1 // pred_check_branch
      %45 = sbr.rel (0) target = $region17
    $region16: #{tpu_custom_call.1} parent=1 // pred_region
      %46 = dma.done [#allocation3], 128
    $region17: #{tpu_custom_call.1} parent=1 // pred_fallthru
      _
    // Predicated region
    $region18: #{tpu_custom_call.1} parent=1 // pred_check
      _
    $region19: #{tpu_custom_call.1} parent=1 // pred_check_branch
      %48 = sbr.rel (0) target = $region21
    $region20: #{tpu_custom_call.1} parent=1 // pred_region
      %49 = dma.done [#allocation5], 6144
    $region21: #{tpu_custom_call.1} parent=1 // pred_fallthru
      _
    // Predicated region
    $region22: #{tpu_custom_call.1} parent=1 // pred_check
      _
    $region23: #{tpu_custom_call.1} parent=1 // pred_check_branch
      %51 = sbr.rel (0) target = $region25
    $region24: #{tpu_custom_call.1} parent=1 // pred_region
      %52 = dma.done [#allocation5], 128
    $region25: #{tpu_custom_call.1} parent=1 // pred_fallthru
      _
    %v54 = vld [vmem:[#allocation6] sm:$0x3]
    %v55 = vld [vmem:[#allocation6 + $0x2] sm:$0x3]
    %v56 = vld [vmem:[#allocation6 + $0x4] sm:$0x3]
    %v57 = vld [vmem:[#allocation6 + $0x6] sm:$0x3]
    %v58 = vld [vmem:[#allocation2] sm:$0xff]
    %v59 = vld [vmem:[#allocation4] sm:$0xff]
    %v60 = vld [vmem:[#allocation4 + $0x8] sm:$0xff]
    %v61 = vpack.c.bf16 %v58, %v58
    %v63 = vlaneseq
    %v64 = vshrl.u32 %v63, 7
    %v65 = vsub.s32 0, %v64
    %v66 = vrot.slane %v54, %v65
    %v67 = vlaneseq
    %v68 = vshrl.u32 %v67, 7
    %v69 = vsub.s32 1, %v68
    %v70 = vrot.slane %v54, %v69
    %v75 = vunpack.c.l.b16 %v59
    %v76 = vunpack.c.h.b16 %v59
    %v77 = vunpack.c.l.b16 %v60
    %v78 = vunpack.c.h.b16 %v60
    %v79 = vpack.c.b16 %v77, %v75
    %v80 = vpack.c.b16 %v78, %v76
    %vm83 = vcmask 130048
    %v85 = vsel %vm83, %v61, 0
    %87 = vmatprep.subr.bf16.mxu0 %v80
    %88 = vmatpush1.bf16.msra.mxu0 %v79
    %89 = vmatprep.subr.bf16.mxu0 0
    %90 = vmatpush1.bf16.msra.mxu0 0
    %91 = vmatprep.subr.bf16.mxu0 0
    %92 = vmatpush1.bf16.msra.mxu0 0
    %93 = vmatprep.subr.bf16.mxu0 0
    %94 = vmatpush1.bf16.msra.mxu0 0
    %95 = vmatprep.subr.bf16.mxu0 0
    %96 = vmatpush1.bf16.msra.mxu0 0
    %97 = vmatprep.subr.bf16.mxu0 0
    %98 = vmatpush1.bf16.msra.mxu0 0
    %99 = vmatprep.subr.bf16.mxu0 0
    %100 = vmatpush1.bf16.msra.mxu0 0
    %101 = vmatprep.subr.bf16.mxu0 0
    %102 = vmatpush1.bf16.msra.mxu0 0
    %103 = vmatprep.subr.bf16.mxu0 0
    %104 = vmatpush1.bf16.msra.mxu0 0
    %105 = vmatprep.subr.bf16.mxu0 0
    %106 = vmatpush1.bf16.msra.mxu0 0
    %107 = vmatprep.subr.bf16.mxu0 0
    %108 = vmatpush1.bf16.msra.mxu0 0
    %109 = vmatprep.subr.bf16.mxu0 0
    %110 = vmatpush1.bf16.msra.mxu0 0
    %111 = vmatprep.subr.bf16.mxu0 0
    %112 = vmatpush1.bf16.msra.mxu0 0
    %113 = vmatprep.subr.bf16.mxu0 0
    %114 = vmatpush1.bf16.msra.mxu0 0
    %115 = vmatprep.subr.bf16.mxu0 0
    %116 = vmatpush1.bf16.msra.mxu0 0
    %117 = vmatprep.subr.bf16.mxu0 0
    %118 = vmatpush1.bf16.msra.mxu0 0
    %119 = vmatprep.mubr.bf16.mxu0 0
    %120 = vmatmul.mubr.bf16.gmra.mrb[0].mxu0 %v85
    %v121 = vpop.f32.mrb[0].mxu0
    %v122 = vadd.f32 %v66, %v121
    %v123 = vpop.f32.mrb[0].mxu0
    %v124 = vadd.f32 %v70, %v123
    %v125 = vpop.f32.mrb[0].mxu0
    %v126 = vpop.f32.mrb[0].mxu0
    %127 = vdwg.mxu0
    %v128 = vmax.f32 %v122, 0.0
    %v129 = vadd.f32 %v128, %v124
    %s130 = scalar_lea.vmem [#allocation4], 128
    %v131 = vld [vmem:[%s130] sm:$0xff]
    %v132 = vld [vmem:[%s130 + $0x8] sm:$0xff]
    %v133 = vld [vmem:[%s130 + $0x10] sm:$0xff]
    %v134 = vld [vmem:[%s130 + $0x18] sm:$0xff]
    %v135 = vld [vmem:[%s130 + $0x20] sm:$0xff]
    %v136 = vld [vmem:[%s130 + $0x28] sm:$0xff]
    %v137 = vld [vmem:[%s130 + $0x30] sm:$0xff]
    %v138 = vld [vmem:[%s130 + $0x38] sm:$0xff]
    %v139 = vld [vmem:[%s130 + $0x40] sm:$0xff]
    %v140 = vld [vmem:[%s130 + $0x48] sm:$0xff]
    %v141 = vld [vmem:[%s130 + $0x50] sm:$0xff]
    %v142 = vld [vmem:[%s130 + $0x58] sm:$0xff]
    %v143 = vld [vmem:[%s130 + $0x60] sm:$0xff]
    %v144 = vld [vmem:[%s130 + $0x68] sm:$0xff]
    %v145 = vld [vmem:[%s130 + $0x70] sm:$0xff]
    %v146 = vld [vmem:[%s130 + $0x78] sm:$0xff]
    %v147 = vpack.c.bf16 %v129, %v129
    %v149 = vlaneseq
    %v150 = vshrl.u32 %v149, 7
    %v151 = vsub.s32 0, %v150
    %v152 = vrot.slane %v55, %v151
    %v153 = vlaneseq
    %v154 = vshrl.u32 %v153, 7
    %v155 = vsub.s32 1, %v154
    %v156 = vrot.slane %v55, %v155
    %v175 = vunpack.c.l.b16 %v131
    %v176 = vunpack.c.h.b16 %v131
    %v177 = vunpack.c.l.b16 %v132
    %v178 = vunpack.c.h.b16 %v132
    %v179 = vunpack.c.l.b16 %v133
    %v180 = vunpack.c.h.b16 %v133
    %v181 = vunpack.c.l.b16 %v134
    %v182 = vunpack.c.h.b16 %v134
    %v183 = vunpack.c.l.b16 %v135
    %v184 = vunpack.c.h.b16 %v135
    %v185 = vunpack.c.l.b16 %v136
    %v186 = vunpack.c.h.b16 %v136
    %v187 = vunpack.c.l.b16 %v137
    %v188 = vunpack.c.h.b16 %v137
    %v189 = vunpack.c.l.b16 %v138
    %v190 = vunpack.c.h.b16 %v138
    %v191 = vunpack.c.l.b16 %v139
    %v192 = vunpack.c.h.b16 %v139
    %v193 = vunpack.c.l.b16 %v140
    %v194 = vunpack.c.h.b16 %v140
    %v195 = vunpack.c.l.b16 %v141
    %v196 = vunpack.c.h.b16 %v141
    %v197 = vunpack.c.l.b16 %v142
    %v198 = vunpack.c.h.b16 %v142
    %v199 = vunpack.c.l.b16 %v143
    %v200 = vunpack.c.h.b16 %v143
    %v201 = vunpack.c.l.b16 %v144
    %v202 = vunpack.c.h.b16 %v144
    %v203 = vunpack.c.l.b16 %v145
    %v204 = vunpack.c.h.b16 %v145
    %v205 = vunpack.c.l.b16 %v146
    %v206 = vunpack.c.h.b16 %v146
    %v207 = vpack.c.b16 %v177, %v175
    %v208 = vpack.c.b16 %v178, %v176
    %v209 = vpack.c.b16 %v181, %v179
    %v210 = vpack.c.b16 %v182, %v180
    %v211 = vpack.c.b16 %v185, %v183
    %v212 = vpack.c.b16 %v186, %v184
    %v213 = vpack.c.b16 %v189, %v187
    %v214 = vpack.c.b16 %v190, %v188
    %v215 = vpack.c.b16 %v193, %v191
    %v216 = vpack.c.b16 %v194, %v192
    %v217 = vpack.c.b16 %v197, %v195
    %v218 = vpack.c.b16 %v198, %v196
    %v219 = vpack.c.b16 %v201, %v199
    %v220 = vpack.c.b16 %v202, %v200
    %v221 = vpack.c.b16 %v205, %v203
    %v222 = vpack.c.b16 %v206, %v204
    %239 = vmatprep.subr.bf16.mxu0 %v208
    %240 = vmatpush1.bf16.msra.mxu0 %v207
    %241 = vmatprep.subr.bf16.mxu0 %v210
    %242 = vmatpush1.bf16.msra.mxu0 %v209
    %243 = vmatprep.subr.bf16.mxu0 %v212
    %244 = vmatpush1.bf16.msra.mxu0 %v211
    %245 = vmatprep.subr.bf16.mxu0 %v214
    %246 = vmatpush1.bf16.msra.mxu0 %v213
    %247 = vmatprep.subr.bf16.mxu0 %v216
    %248 = vmatpush1.bf16.msra.mxu0 %v215
    %249 = vmatprep.subr.bf16.mxu0 %v218
    %250 = vmatpush1.bf16.msra.mxu0 %v217
    %251 = vmatprep.subr.bf16.mxu0 %v220
    %252 = vmatpush1.bf16.msra.mxu0 %v219
    %253 = vmatprep.subr.bf16.mxu0 %v222
    %254 = vmatpush1.bf16.msra.mxu0 %v221
    %255 = vmatprep.subr.bf16.mxu0 0
    %256 = vmatpush1.bf16.msra.mxu0 0
    %257 = vmatprep.subr.bf16.mxu0 0
    %258 = vmatpush1.bf16.msra.mxu0 0
    %259 = vmatprep.subr.bf16.mxu0 0
    %260 = vmatpush1.bf16.msra.mxu0 0
    %261 = vmatprep.subr.bf16.mxu0 0
    %262 = vmatpush1.bf16.msra.mxu0 0
    %263 = vmatprep.subr.bf16.mxu0 0
    %264 = vmatpush1.bf16.msra.mxu0 0
    %265 = vmatprep.subr.bf16.mxu0 0
    %266 = vmatpush1.bf16.msra.mxu0 0
    %267 = vmatprep.subr.bf16.mxu0 0
    %268 = vmatpush1.bf16.msra.mxu0 0
    %269 = vmatprep.subr.bf16.mxu0 0
    %270 = vmatpush1.bf16.msra.mxu0 0
    %271 = vmatprep.mubr.bf16.mxu0 0
    %272 = vmatmul.mubr.bf16.gmra.mrb[0].mxu0 %v147
    %v273 = vpop.f32.mrb[0].mxu0
    %v274 = vadd.f32 %v152, %v273
    %v275 = vpop.f32.mrb[0].mxu0
    %v276 = vadd.f32 %v156, %v275
    %v277 = vpop.f32.mrb[0].mxu0
    %v278 = vpop.f32.mrb[0].mxu0
    %279 = vdwg.mxu0
    %v280 = vmax.f32 %v274, 0.0
    %v281 = vadd.f32 %v280, %v276
    %s282 = scalar_lea.vmem [#allocation4], 256
    %v283 = vld [vmem:[%s282] sm:$0xff]
    %v284 = vld [vmem:[%s282 + $0x8] sm:$0xff]
    %v285 = vld [vmem:[%s282 + $0x10] sm:$0xff]
    %v286 = vld [vmem:[%s282 + $0x18] sm:$0xff]
    %v287 = vld [vmem:[%s282 + $0x20] sm:$0xff]
    %v288 = vld [vmem:[%s282 + $0x28] sm:$0xff]
    %v289 = vld [vmem:[%s282 + $0x30] sm:$0xff]
    %v290 = vld [vmem:[%s282 + $0x38] sm:$0xff]
    %v291 = vld [vmem:[%s282 + $0x40] sm:$0xff]
    %v292 = vld [vmem:[%s282 + $0x48] sm:$0xff]
    %v293 = vld [vmem:[%s282 + $0x50] sm:$0xff]
    %v294 = vld [vmem:[%s282 + $0x58] sm:$0xff]
    %v295 = vld [vmem:[%s282 + $0x60] sm:$0xff]
    %v296 = vld [vmem:[%s282 + $0x68] sm:$0xff]
    %v297 = vld [vmem:[%s282 + $0x70] sm:$0xff]
    %v298 = vld [vmem:[%s282 + $0x78] sm:$0xff]
    %v299 = vpack.c.bf16 %v281, %v281
    %v301 = vlaneseq
    %v302 = vshrl.u32 %v301, 7
    %v303 = vsub.s32 0, %v302
    %v304 = vrot.slane %v56, %v303
    %v305 = vlaneseq
    %v306 = vshrl.u32 %v305, 7
    %v307 = vsub.s32 1, %v306
    %v308 = vrot.slane %v56, %v307
    %v327 = vunpack.c.l.b16 %v283
    %v328 = vunpack.c.h.b16 %v283
    %v329 = vunpack.c.l.b16 %v284
    %v330 = vunpack.c.h.b16 %v284
    %v331 = vunpack.c.l.b16 %v285
    %v332 = vunpack.c.h.b16 %v285
    %v333 = vunpack.c.l.b16 %v286
    %v334 = vunpack.c.h.b16 %v286
    %v335 = vunpack.c.l.b16 %v287
    %v336 = vunpack.c.h.b16 %v287
    %v337 = vunpack.c.l.b16 %v288
    %v338 = vunpack.c.h.b16 %v288
    %v339 = vunpack.c.l.b16 %v289
    %v340 = vunpack.c.h.b16 %v289
    %v341 = vunpack.c.l.b16 %v290
    %v342 = vunpack.c.h.b16 %v290
    %v343 = vunpack.c.l.b16 %v291
    %v344 = vunpack.c.h.b16 %v291
    %v345 = vunpack.c.l.b16 %v292
    %v346 = vunpack.c.h.b16 %v292
    %v347 = vunpack.c.l.b16 %v293
    %v348 = vunpack.c.h.b16 %v293
    %v349 = vunpack.c.l.b16 %v294
    %v350 = vunpack.c.h.b16 %v294
    %v351 = vunpack.c.l.b16 %v295
    %v352 = vunpack.c.h.b16 %v295
    %v353 = vunpack.c.l.b16 %v296
    %v354 = vunpack.c.h.b16 %v296
    %v355 = vunpack.c.l.b16 %v297
    %v356 = vunpack.c.h.b16 %v297
    %v357 = vunpack.c.l.b16 %v298
    %v358 = vunpack.c.h.b16 %v298
    %v359 = vpack.c.b16 %v329, %v327
    %v360 = vpack.c.b16 %v330, %v328
    %v361 = vpack.c.b16 %v333, %v331
    %v362 = vpack.c.b16 %v334, %v332
    %v363 = vpack.c.b16 %v337, %v335
    %v364 = vpack.c.b16 %v338, %v336
    %v365 = vpack.c.b16 %v341, %v339
    %v366 = vpack.c.b16 %v342, %v340
    %v367 = vpack.c.b16 %v345, %v343
    %v368 = vpack.c.b16 %v346, %v344
    %v369 = vpack.c.b16 %v349, %v347
    %v370 = vpack.c.b16 %v350, %v348
    %v371 = vpack.c.b16 %v353, %v351
    %v372 = vpack.c.b16 %v354, %v352
    %v373 = vpack.c.b16 %v357, %v355
    %v374 = vpack.c.b16 %v358, %v356
    %391 = vmatprep.subr.bf16.mxu0 %v360
    %392 = vmatpush1.bf16.msra.mxu0 %v359
    %393 = vmatprep.subr.bf16.mxu0 %v362
    %394 = vmatpush1.bf16.msra.mxu0 %v361
    %395 = vmatprep.subr.bf16.mxu0 %v364
    %396 = vmatpush1.bf16.msra.mxu0 %v363
    %397 = vmatprep.subr.bf16.mxu0 %v366
    %398 = vmatpush1.bf16.msra.mxu0 %v365
    %399 = vmatprep.subr.bf16.mxu0 %v368
    %400 = vmatpush1.bf16.msra.mxu0 %v367
    %401 = vmatprep.subr.bf16.mxu0 %v370
    %402 = vmatpush1.bf16.msra.mxu0 %v369
    %403 = vmatprep.subr.bf16.mxu0 %v372
    %404 = vmatpush1.bf16.msra.mxu0 %v371
    %405 = vmatprep.subr.bf16.mxu0 %v374
    %406 = vmatpush1.bf16.msra.mxu0 %v373
    %407 = vmatprep.subr.bf16.mxu0 0
    %408 = vmatpush1.bf16.msra.mxu0 0
    %409 = vmatprep.subr.bf16.mxu0 0
    %410 = vmatpush1.bf16.msra.mxu0 0
    %411 = vmatprep.subr.bf16.mxu0 0
    %412 = vmatpush1.bf16.msra.mxu0 0
    %413 = vmatprep.subr.bf16.mxu0 0
    %414 = vmatpush1.bf16.msra.mxu0 0
    %415 = vmatprep.subr.bf16.mxu0 0
    %416 = vmatpush1.bf16.msra.mxu0 0
    %417 = vmatprep.subr.bf16.mxu0 0
    %418 = vmatpush1.bf16.msra.mxu0 0
    %419 = vmatprep.subr.bf16.mxu0 0
    %420 = vmatpush1.bf16.msra.mxu0 0
    %421 = vmatprep.subr.bf16.mxu0 0
    %422 = vmatpush1.bf16.msra.mxu0 0
    %423 = vmatprep.mubr.bf16.mxu0 0
    %424 = vmatmul.mubr.bf16.gmra.mrb[0].mxu0 %v299
    %v425 = vpop.f32.mrb[0].mxu0
    %v426 = vadd.f32 %v304, %v425
    %v427 = vpop.f32.mrb[0].mxu0
    %v428 = vadd.f32 %v308, %v427
    %v429 = vpop.f32.mrb[0].mxu0
    %v430 = vpop.f32.mrb[0].mxu0
    %431 = vdwg.mxu0
    %v432 = vmax.f32 %v426, 0.0
    %v433 = vadd.f32 %v432, %v428
    %v435 = vrot.slane %v57, 1
    %v436 = vlaneseq
    %v437 = vshrl.u32 %v436, 7
    %v438 = vsub.s32 0, %v437
    %v439 = vrot.slane %v57, %v438
    %v441 = vmul.f32 %v433, %v439
    %442 = vadd.xlane.f32.xlu0 %v441
    %v443 = vpop.xlane.xlu0 %442
    %v444 = vlaneseq
    %v445 = vshrl.u32 %v444, 7
    %v446 = vsub.s32 0, %v445
    %v447 = vrot.slane %v435, %v446
    %v449 = vadd.f32 %v443, %v447
    %vm450 = vcmask 7168
    %451 = vst.msk [vmem:[%s3] sm:$0xff] %vm450, %v449
    // Predicated region
    $region26: #{tpu_custom_call.1} parent=1 // pred_check
      _
    $region27: #{tpu_custom_call.1} parent=1 // pred_check_branch
      %453 = sbr.rel (0) target = $region29
    $region28: #{tpu_custom_call.1} parent=1 // pred_region
      _
    $region29: #{tpu_custom_call.1} parent=1 // pred_fallthru
      _
    // Predicated region
    $region30: #{tpu_custom_call.1} parent=1 // pred_check
      _
    $region31: #{tpu_custom_call.1} parent=1 // pred_check_branch
      %455 = sbr.rel (0) target = $region33
    $region32: #{tpu_custom_call.1} parent=1 // pred_region
      _
    $region33: #{tpu_custom_call.1} parent=1 // pred_fallthru
      _
    %456 = vsyncpa [#allocation3], 1
    %457 = vsyncpa [#allocation5], 1

</llo_original>
